<compile_context>
chip_gen: v7x
topology: tpu7x:2x2x1
jax: 0.10.0
libtpu: 0.0.40
codegen_flags: <defaults>
</compile_context>

<pallas_src>
import jax
import jax.numpy as jnp
from jax.experimental import pallas as pl
from jax.experimental.pallas import tpu as pltpu


def _round_up(x: int, m: int) -> int:
    return ((x + m - 1) // m) * m


def _cdiv(a: int, b: int) -> int:
    return (a + b - 1) // b


# --------------------------------------------------------------------------
# Kernels
# --------------------------------------------------------------------------

def _linear_resident_kernel(x_ref, w_ref, b_ref, o_ref):
    """Weight/bias resident in VMEM; one MXU contraction per M tile."""
    # x_ref: [tm, D], w_ref: [D, Cp], b_ref: [1, Cp], o_ref: [tm, Cp]
    acc = jnp.dot(x_ref[...], w_ref[...], preferred_element_type=jnp.float32)
    o_ref[...] = (acc + b_ref[...].astype(jnp.float32)).astype(o_ref.dtype)


def _linear_tiled_kernel(x_ref, w_ref, b_ref, o_ref, acc_ref):
    """K-tiled accumulation for feature dims too large for residency."""
    # x_ref: [tm, tk], w_ref: [tk, Cp], b_ref: [1, Cp], o_ref/acc_ref: [tm, Cp]
    k = pl.program_id(1)

    @pl.when(k == 0)
    def _():
        acc_ref[...] = jnp.zeros_like(acc_ref)

    acc_ref[...] += jnp.dot(x_ref[...], w_ref[...],
                            preferred_element_type=jnp.float32)

    @pl.when(k == pl.num_programs(1) - 1)
    def _():
        o_ref[...] = (acc_ref[...] + b_ref[...].astype(jnp.float32)
                      ).astype(o_ref.dtype)


# --------------------------------------------------------------------------
# Wrapper
# --------------------------------------------------------------------------

def logistic_regression_forward(x, weight, bias, *, tm=512, tk=1024,
                                vmem_budget_bytes=None, force_tiled=False):
    """Forward pass of LogisticRegression: x @ weight.T + bias.

    x:      [B, input_size]
    weight: [num_classes, input_size]  (PyTorch nn.Linear layout)
    bias:   [num_classes]
    returns [B, num_classes]
    """
    B, D = x.shape
    C, D2 = weight.shape
    assert D == D2, f"feature mismatch: {D} vs {D2}"
    assert bias.shape == (C,)

    itemsize = jnp.dtype(x.dtype).itemsize

    # VMEM budget: 75% of per-core physical VMEM (v7x: 64 MiB -> 48 MiB,
    # v5e/v6e: 128 MiB -> 96 MiB).  Conservative v7x-safe fallback if the
    # runtime query is unavailable.
    if vmem_budget_bytes is None:
        phys = 64 * 1024 * 1024
        try:
            phys = int(pltpu.get_tpu_info().vmem_capacity_bytes)
        except Exception:
            pass
        vmem_budget_bytes = int(phys * 0.75)
    vmem_budget_bytes = int(vmem_budget_bytes)

    # Lane-dense output: pad the (small) class dim to a multiple of 128.
    # Only weight / bias (tiny, static) get padded -- x is never copied.
    Cp = _round_up(C, 128)

    # ---- M-tile selection ------------------------------------------------
    tm = max(8, min(int(tm), _round_up(B, 8)))
    # Prefer >= 2 M tiles so both v7x TensorCores get work (harmless on 1-TC
    # chips: one extra ~0.35us grid step at most).
    if B > 8 and _cdiv(B, tm) == 1:
        tm = _round_up(_cdiv(B, 2), 8)

    def _resident_bytes(tm_):
        # Conservative: assume double-buffering of every operand.
        return 2 * (tm_ * D + D * Cp + Cp + tm_ * Cp) * itemsize

    tm_res = tm
    while tm_res > 8 and _resident_bytes(tm_res) > vmem_budget_bytes:
        tm_res = max(8, (tm_res // 2 // 8) * 8)

    use_resident = (not force_tiled) and _resident_bytes(tm_res) <= vmem_budget_bytes

    if use_resident:
        # ------------------------------------------------------------------
        # Fast path: weight + bias resident in VMEM, 1-D grid over the batch.
        # ------------------------------------------------------------------
        tm = tm_res
        grid_m = _cdiv(B, tm)  # ragged last block handled by Pallas (no x pad)

        w_t = jnp.pad(weight.T, ((0, 0), (0, Cp - C)))          # [D, Cp]
        b_p = jnp.pad(bias, (0, Cp - C)).reshape(1, Cp)          # [1, Cp]

        cost = pl.CostEstimate(
            flops=2 * B * D * Cp,
            transcendentals=0,
            bytes_accessed=(B * D + D * Cp + Cp + B * Cp) * itemsize,
        )

        out = pl.pallas_call(
            _linear_resident_kernel,
            out_shape=jax.ShapeDtypeStruct((B, Cp), x.dtype),
            grid_spec=pltpu.PrefetchScalarGridSpec(
                num_scalar_prefetch=0,
                grid=(grid_m,),
                in_specs=[
                    pl.BlockSpec((tm, D), lambda i: (i, 0)),    # x streams over M
                    pl.BlockSpec((D, Cp), lambda i: (0, 0)),    # weight resident
                    pl.BlockSpec((1, Cp), lambda i: (0, 0)),    # bias resident
                ],
                out_specs=pl.BlockSpec((tm, Cp), lambda i: (i, 0)),
            ),
            compiler_params=pltpu.CompilerParams(
                dimension_semantics=("parallel",),
                vmem_limit_bytes=vmem_budget_bytes,
            ),
            cost_estimate=cost,
        )(x, w_t, b_p)
        return out[:, :C]

    # ----------------------------------------------------------------------
    # Fallback: K-tiled accumulation (huge input_size).  Class dim stays whole
    # (tn == Cp) so x is streamed exactly once; tk divides round_up(D, 128).
    # ----------------------------------------------------------------------
    Dp = _round_up(D, 128)
    q = Dp // 128

    def _tiled_bytes(tm_, tk_):
        return (2 * (tm_ * tk_ + tk_ * Cp + Cp + tm_ * Cp) * itemsize
                + tm_ * Cp * 4)

    tk_sel = 128
    max_mult = max(1, min(q, int(tk) // 128))
    for t in range(max_mult, 0, -1):
        if q % t == 0 and _tiled_bytes(tm, 128 * t) <= vmem_budget_bytes:
            tk_sel = 128 * t
            break
    while tm > 8 and _tiled_bytes(tm, tk_sel) > vmem_budget_bytes:
        tm = max(8, (tm // 2 // 8) * 8)

    grid = (_cdiv(B, tm), Dp // tk_sel)

    # Zero-pad x along D only when misaligned (<=127 extra columns); zero-pad
    # the tiny weight/bias.  Zero padding is exact for the contraction.
    x_p = x if Dp == D else jnp.pad(x, ((0, 0), (0, Dp - D)))
    w_tp = jnp.pad(weight.T, ((0, Dp - D), (0, Cp - C)))         # [Dp, Cp]
    b_p = jnp.pad(bias, (0, Cp - C)).reshape(1, Cp)              # [1, Cp]

    cost = pl.CostEstimate(
        flops=2 * B * Dp * Cp,
        transcendentals=0,
        bytes_accessed=(B * Dp                      # x streamed once
                        + grid[0] * Dp * Cp         # weight re-streamed per M tile
                        + Cp + B * Cp) * itemsize,
    )

    out = pl.pallas_call(
        _linear_tiled_kernel,
        out_shape=jax.ShapeDtypeStruct((B, Cp), x.dtype),
        grid_spec=pltpu.PrefetchScalarGridSpec(
            num_scalar_prefetch=0,
            grid=grid,
            in_specs=[
                pl.BlockSpec((tm, tk_sel), lambda i, k: (i, k)),   # x tile
                pl.BlockSpec((tk_sel, Cp), lambda i, k: (k, 0)),   # weight k-slab
                pl.BlockSpec((1, Cp), lambda i, k: (0, 0)),        # bias resident
            ],
            out_specs=pl.BlockSpec((tm, Cp), lambda i, k: (i, 0)),
            scratch_shapes=[pltpu.VMEM((tm, Cp), jnp.float32)],
        ),
        compiler_params=pltpu.CompilerParams(
            dimension_semantics=("parallel", "arbitrary"),
            vmem_limit_bytes=vmem_budget_bytes,
        ),
        cost_estimate=cost,
    )(x_p, w_tp, b_p)
    return out[:, :C]


# --------------------------------------------------------------------------
# Self-test
# --------------------------------------------------------------------------

if __name__ == "__main__":
    key = jax.random.PRNGKey(0)
    k_x, k_w, k_b, k_x2, k_w2, k_b2 = jax.random.split(key, 6)

    # --- Test 1: small, typical shape (resident fast path, grid=(1,)) ------
    batch, input_size, num_classes = 8, 32, 16
    x = jax.random.normal(k_x, (batch, input_size), dtype=jnp.float32)
    bound = 1.0 / (input_size ** 0.5)
    weight = jax.random.uniform(k_w, (num_classes, input_size),
                                minval=-bound, maxval=bound, dtype=jnp.float32)
    bias = jax.random.uniform(k_b, (num_classes,),
                              minval=-bound, maxval=bound, dtype=jnp.float32)

    out = jax.block_until_ready(logistic_regression_forward(x, weight, bias))
    ref = x @ weight.T + bias
    assert out.shape == (batch, num_classes)
    assert jnp.allclose(out, ref, atol=1e-5, rtol=1e-5)

    # --- Test 2: misaligned shapes + forced K-tiled path --------------------
    # Exercises: ragged last M block (B=50, tm=32), D padding (300 -> 384),
    # multi-step k accumulation (tk=128 -> 3 k steps), padded-class slicing.
    B2, D2_, C2 = 50, 300, 10
    x2 = jax.random.normal(k_x2, (B2, D2_), dtype=jnp.float32)
    bound2 = 1.0 / (D2_ ** 0.5)
    w2 = jax.random.uniform(k_w2, (C2, D2_),
                            minval=-bound2, maxval=bound2, dtype=jnp.float32)
    b2 = jax.random.uniform(k_b2, (C2,),
                            minval=-bound2, maxval=bound2, dtype=jnp.float32)

    out2 = jax.block_until_ready(
        logistic_regression_forward(x2, w2, b2, tm=32, tk=128, force_tiled=True))
    ref2 = x2 @ w2.T + b2
    assert out2.shape == (B2, C2)
    assert jnp.allclose(out2, ref2, atol=1e-4, rtol=1e-5)

    print("KERNEL_OK")
</pallas_src>

<mosaic_0001>
module attributes {stable_mosaic.version = 11 : i64} {
  func.func @_linear_resident_kernel(%arg0: i32, %arg1: memref<8x32xf32, #tpu.memory_space<vmem>>, %arg2: memref<32x128xf32, #tpu.memory_space<vmem>>, %arg3: memref<1x128xf32, #tpu.memory_space<vmem>>, %arg4: memref<8x128xf32, #tpu.memory_space<vmem>>) attributes {dimension_semantics = [#tpu.dimension_semantics<parallel>], iteration_bounds = array<i64: 1>, scalar_prefetch = 0 : i64, scratch_operands = 0 : i64, tpu.core_type = #tpu.core_type<tc>, window_params = [{transform_indices = @transform_0, window_bounds = array<i64: 8, 32>}, {pipeline_mode = #tpu.pipeline_mode<synchronous>, transform_indices = @transform_1, window_bounds = array<i64: 32, 128>}, {pipeline_mode = #tpu.pipeline_mode<synchronous>, transform_indices = @transform_2, window_bounds = array<i64: 1, 128>}, {transform_indices = @transform_3, window_bounds = array<i64: 8, 128>}]} {
    %c0 = arith.constant 0 : index
    %c0_0 = arith.constant 0 : index
    %0 = vector.load %arg1[%c0, %c0_0] : memref<8x32xf32, #tpu.memory_space<vmem>>, vector<8x32xf32>
    %c0_1 = arith.constant 0 : index
    %c0_2 = arith.constant 0 : index
    %1 = vector.load %arg2[%c0_1, %c0_2] : memref<32x128xf32, #tpu.memory_space<vmem>>, vector<32x128xf32>
    %cst = arith.constant dense<0.000000e+00> : vector<8x128xf32>
    %2 = tpu.matmul %0, %1, %cst {dimension_numbers = #tpu.dot_dimension_numbers<[1], [0], [0], [1], [0, 0, 1, 1], [], []>} : vector<8x32xf32>, vector<32x128xf32>, vector<8x128xf32> -> vector<8x128xf32>
    %c0_3 = arith.constant 0 : index
    %c0_4 = arith.constant 0 : index
    %3 = vector.load %arg3[%c0_3, %c0_4] : memref<1x128xf32, #tpu.memory_space<vmem>>, vector<1x128xf32>
    %4 = vector.broadcast %3 : vector<1x128xf32> to vector<8x128xf32>
    %5 = arith.addf %2, %4 : vector<8x128xf32>
    %c0_5 = arith.constant 0 : index
    %c0_6 = arith.constant 0 : index
    %6 = vector.load %arg4[%c0_5, %c0_6] : memref<8x128xf32, #tpu.memory_space<vmem>>, vector<8x128xf32>
    tpu.vector_store %arg4[%c0_5, %c0_6], %5 {strides = array<i32>} : memref<8x128xf32, #tpu.memory_space<vmem>>, vector<8x128xf32>,
    return
  }
  func.func @transform_0(%arg0: i32) -> (i32, i32) {
    %c0_i32 = arith.constant 0 : i32
    %c0_i32_0 = arith.constant 0 : i32
    return %arg0, %c0_i32 : i32, i32
  }
  func.func @transform_1(%arg0: i32) -> (i32, i32) {
    %c0_i32 = arith.constant 0 : i32
    %c0_i32_0 = arith.constant 0 : i32
    %c0_i32_1 = arith.constant 0 : i32
    return %c0_i32, %c0_i32_0 : i32, i32
  }
  func.func @transform_2(%arg0: i32) -> (i32, i32) {
    %c0_i32 = arith.constant 0 : i32
    %c0_i32_0 = arith.constant 0 : i32
    %c0_i32_1 = arith.constant 0 : i32
    return %c0_i32, %c0_i32_0 : i32, i32
  }
  func.func @transform_3(%arg0: i32) -> (i32, i32) {
    %c0_i32 = arith.constant 0 : i32
    %c0_i32_0 = arith.constant 0 : i32
    return %arg0, %c0_i32 : i32, i32
  }
}

</mosaic_0001>

<llo_original>
// kernel: tpu_custom_call.1
$region0: #{tpu_custom_call.1}
  #allocation0 [shape = 'u32[]', space=smem, size = 0x4, offset = 0x4, fixed_abs, tag = 'smem constant byte address 0x4 - core index']
  #allocation1 [shape = 'u32[144,128]{1,0:T(1,128)}', space=vmem, size = 0x12000, scoped, tag = 'internal scratch']
  %s0 = inlined_call_operand.hbm [shape: f32[8,32], index: 0, kind: input, shape index: {}]
  %s1 = inlined_call_operand.hbm [shape: f32[32,128], index: 1, kind: input, shape index: {}]
  %s2 = inlined_call_operand.vmem [shape: f32[1,128], index: 2, kind: input, shape index: {}]
  %s3 = inlined_call_operand.hbm [shape: f32[8,128], index: 3, kind: output, shape index: {}]
  %s4 = sld [smem:[#allocation0]]
  $region30: #{tpu_custom_call.1} parent=0
    _
  %s6 = ssub.s32 1, %s4
  %s7 = scalar_select 0, %s6, %s4
  $region1: #{tpu_custom_call.1} parent=0
    #allocation2 [shape = 'u8[4096]{0}', space=vmem, size = 0x1000, scoped, tag = 'input window, operand 0, single buffered']
    #allocation3 [shape = 's32[1]{0}', space=sflag, size = 0x4, scoped, tag = 'scoped memory for tpu_custom_call.1']
    #allocation4 [shape = 's32[1]{0}', space=sflag, size = 0x4, scoped, tag = 'scoped memory for tpu_custom_call.1']
    #allocation5 [shape = 'u8[16384]{0}', space=vmem, size = 0x4000, scoped, tag = 'input window, operand 1, single buffered']
    #allocation6 [shape = 's32[1]{0}', space=sflag, size = 0x4, scoped, tag = 'scoped memory for tpu_custom_call.1']
    #allocation7 [shape = 'u8[4096]{0}', space=vmem, size = 0x1000, scoped, tag = 'output window, operand 0, single buffered']
    %8 = vsyncpa [#allocation3], 0
    %9 = vsyncpa [#allocation6], 0
    %10 = vsyncpa [#allocation4], 0
    // Predicated region
    $region2: #{tpu_custom_call.1} parent=1 // pred_check
      _
    $region3: #{tpu_custom_call.1} parent=1 // pred_check_branch
      %12 = sbr.rel (0) target = $region5
    $region4: #{tpu_custom_call.1} parent=1 // pred_region
      %s14 = ssub.s32 128, 128
      %15 = vsyncadd [#allocation3], %s14
      %s17 = sshll.u32 [#allocation2], 4
      %s18 = int_to_ptr.vmem [resolvable:$true] %s17
      %20 = dma.hbm_to_vmem [thread:$0]  %s0, 128, %s18, [#allocation3]
    $region5: #{tpu_custom_call.1} parent=1 // pred_fallthru
      _
    // Predicated region
    $region6: #{tpu_custom_call.1} parent=1 // pred_check
      _
    $region7: #{tpu_custom_call.1} parent=1 // pred_check_branch
      %22 = sbr.rel (0) target = $region9
    $region8: #{tpu_custom_call.1} parent=1 // pred_region
      %s24 = ssub.s32 512, 512
      %25 = vsyncadd [#allocation6], %s24
      %s26 = sshll.u32 [#allocation5], 4
      %s27 = int_to_ptr.vmem [resolvable:$true] %s26
      %32 = dma.hbm_to_vmem [thread:$0]  %s1, 512, %s27, [#allocation6], 128, 128, 8
    $region9: #{tpu_custom_call.1} parent=1 // pred_fallthru
      _
    // Predicated region
    $region10: #{tpu_custom_call.1} parent=1 // pred_check
      _
    $region11: #{tpu_custom_call.1} parent=1 // pred_check_branch
      %34 = sbr.rel (0) target = $region13
    $region12: #{tpu_custom_call.1} parent=1 // pred_region
      _
    $region13: #{tpu_custom_call.1} parent=1 // pred_fallthru
      _
    // Predicated region
    $region14: #{tpu_custom_call.1} parent=1 // pred_check
      _
    $region15: #{tpu_custom_call.1} parent=1 // pred_check_branch
      %36 = sbr.rel (0) target = $region17
    $region16: #{tpu_custom_call.1} parent=1 // pred_region
      %37 = dma.done [#allocation3], 128
    $region17: #{tpu_custom_call.1} parent=1 // pred_fallthru
      _
    // Predicated region
    $region18: #{tpu_custom_call.1} parent=1 // pred_check
      _
    $region19: #{tpu_custom_call.1} parent=1 // pred_check_branch
      %39 = sbr.rel (0) target = $region21
    $region20: #{tpu_custom_call.1} parent=1 // pred_region
      %40 = dma.done [#allocation6], 512
    $region21: #{tpu_custom_call.1} parent=1 // pred_fallthru
      _
    %v41 = vld [vmem:[#allocation2] sm:$0xff]
    %v42 = vld [vmem:[#allocation5] sm:$0xff]
    %v43 = vld [vmem:[#allocation5 + $0x8] sm:$0xff]
    %v44 = vld [vmem:[#allocation5 + $0x10] sm:$0xff]
    %v45 = vld [vmem:[#allocation5 + $0x18] sm:$0xff]
    %v46 = vld [vmem:[%s2] sm:$0x1]
    %v48 = vlaneseq
    %v49 = vshrl.u32 %v48, 7
    %v50 = vsub.s32 0, %v49
    %v51 = vrot.slane %v46, %v50
    %vm53 = vcmask 261120
    %v55 = vsel %vm53, %v41, 0
    %57 = vmatprep.subr.mxu0 0.0
    %58 = vmatpush1.msra.mxu0 %v42
    %59 = vmatprep.subr.mxu0 0.0
    %60 = vmatpush1.msra.mxu0 %v43
    %61 = vmatprep.subr.mxu0 0.0
    %62 = vmatpush1.msra.mxu0 %v44
    %63 = vmatprep.subr.mxu0 0.0
    %64 = vmatpush1.msra.mxu0 %v45
    %65 = vmatprep.subr.mxu0 0.0
    %66 = vmatpush1.msra.mxu0 0.0
    %67 = vmatprep.subr.mxu0 0.0
    %68 = vmatpush1.msra.mxu0 0.0
    %69 = vmatprep.subr.mxu0 0.0
    %70 = vmatpush1.msra.mxu0 0.0
    %71 = vmatprep.subr.mxu0 0.0
    %72 = vmatpush1.msra.mxu0 0.0
    %73 = vmatprep.subr.mxu0 0.0
    %74 = vmatpush1.msra.mxu0 0.0
    %75 = vmatprep.subr.mxu0 0.0
    %76 = vmatpush1.msra.mxu0 0.0
    %77 = vmatprep.subr.mxu0 0.0
    %78 = vmatpush1.msra.mxu0 0.0
    %79 = vmatprep.subr.mxu0 0.0
    %80 = vmatpush1.msra.mxu0 0.0
    %81 = vmatprep.subr.mxu0 0.0
    %82 = vmatpush1.msra.mxu0 0.0
    %83 = vmatprep.subr.mxu0 0.0
    %84 = vmatpush1.msra.mxu0 0.0
    %85 = vmatprep.subr.mxu0 0.0
    %86 = vmatpush1.msra.mxu0 0.0
    %87 = vmatprep.subr.mxu0 0.0
    %88 = vmatpush1.msra.mxu0 0.0
    %89 = vmatprep.subr.mxu0 0.0
    %90 = vmatpush1.msra.mxu0 0.0
    %91 = vmatprep.subr.mxu0 0.0
    %92 = vmatpush1.msra.mxu0 0.0
    %93 = vmatprep.subr.mxu0 0.0
    %94 = vmatpush1.msra.mxu0 0.0
    %95 = vmatprep.subr.mxu0 0.0
    %96 = vmatpush1.msra.mxu0 0.0
    %97 = vmatprep.subr.mxu0 0.0
    %98 = vmatpush1.msra.mxu0 0.0
    %99 = vmatprep.subr.mxu0 0.0
    %100 = vmatpush1.msra.mxu0 0.0
    %101 = vmatprep.subr.mxu0 0.0
    %102 = vmatpush1.msra.mxu0 0.0
    %103 = vmatprep.subr.mxu0 0.0
    %104 = vmatpush1.msra.mxu0 0.0
    %105 = vmatprep.subr.mxu0 0.0
    %106 = vmatpush1.msra.mxu0 0.0
    %107 = vmatprep.subr.mxu0 0.0
    %108 = vmatpush1.msra.mxu0 0.0
    %109 = vmatprep.subr.mxu0 0.0
    %110 = vmatpush1.msra.mxu0 0.0
    %111 = vmatprep.subr.mxu0 0.0
    %112 = vmatpush1.msra.mxu0 0.0
    %113 = vmatprep.subr.mxu0 0.0
    %114 = vmatpush1.msra.mxu0 0.0
    %115 = vmatprep.subr.mxu0 0.0
    %116 = vmatpush1.msra.mxu0 0.0
    %117 = vmatprep.subr.mxu0 0.0
    %118 = vmatpush1.msra.mxu0 0.0
    %119 = vmatprep.subr.mxu0 0.0
    %120 = vmatpush1.msra.mxu0 0.0
    %121 = vmatprep.mubr.f32.mxu0 0.0
    %122 = vmatmul.mubr.f32.gmra.mrb[0].mxu0 %v55
    %v123 = vpop.f32.mrb[0].mxu0
    %v124 = vadd.f32 %v51, %v123
    %v125 = vpop.f32.mrb[0].mxu0
    %126 = vdwg.mxu0
    %127 = vst [vmem:[#allocation7] sm:$0xff] %v124
    // Predicated region
    $region22: #{tpu_custom_call.1} parent=1 // pred_check
      _
    $region23: #{tpu_custom_call.1} parent=1 // pred_check_branch
      %129 = sbr.rel (0) target = $region25
    $region24: #{tpu_custom_call.1} parent=1 // pred_region
      %s131 = ssub.s32 128, 128
      %132 = vsyncadd [#allocation4], %s131
      %s134 = sshll.u32 [#allocation7], 4
      %s135 = int_to_ptr.vmem [resolvable:$true] %s134
      %137 = dma.vmem_to_hbm [thread:$0]  %s135, 128, %s3, [#allocation4]
    $region25: #{tpu_custom_call.1} parent=1 // pred_fallthru
      _
    // Predicated region
    $region26: #{tpu_custom_call.1} parent=1 // pred_check
      _
    $region27: #{tpu_custom_call.1} parent=1 // pred_check_branch
      %139 = sbr.rel (0) target = $region29
    $region28: #{tpu_custom_call.1} parent=1 // pred_region
      %140 = dma.done [#allocation4], 128
    $region29: #{tpu_custom_call.1} parent=1 // pred_fallthru
      _
    %141 = vsyncpa [#allocation3], 1
    %142 = vsyncpa [#allocation6], 1
    %143 = vsyncpa [#allocation4], 1

</llo_original>
